<compile_context>
chip_gen: v7x
topology: tpu7x:2x2x1
jax: 0.10.0
libtpu: 0.0.40
codegen_flags: <defaults>
</compile_context>

<pallas_src>
import functools
import math

import jax
import jax.numpy as jnp
from jax import lax
from jax.experimental import pallas as pl
from jax.experimental.pallas import tpu as pltpu

_LN_EPS = 1e-5
# 48 MiB: fits v7x's 64 MiB per-TC VMEM with headroom for Mosaic internal scratch, and is far
# below the actual per-step footprint (a few MB at ViT sizes); trivially fine on v5e/v6e.
_VMEM_LIMIT = 48 * 1024 * 1024


def _layernorm_f32(x_f32, gamma_f32, beta_f32, eps):
    mu = jnp.mean(x_f32, axis=-1, keepdims=True)
    xc = x_f32 - mu
    var = jnp.mean(xc * xc, axis=-1, keepdims=True)
    return xc * lax.rsqrt(var + eps) * gamma_f32 + beta_f32


def _gelu_exact(x_f32):
    # Exact (erf-based) GELU matching torch.nn.GELU() default.  erf via the Abramowitz & Stegun
    # 7.1.26 polynomial (max abs err ~1.5e-7).  The polynomial's 1/(1 + p*|z|) divide is done
    # with an EUP approx reciprocal + one Newton step so the VPU path is mul/add only.
    inv_sqrt2 = 0.7071067811865476
    z = x_f32 * inv_sqrt2
    sgn = jnp.where(z >= 0.0, 1.0, -1.0)
    az = jnp.abs(z)
    den = 1.0 + 0.3275911 * az
    t = pl.reciprocal(den, approx=True)
    t = t * (2.0 - den * t)            # one Newton step; den >= 1 so this is well conditioned
    poly = ((((1.061405429 * t - 1.453152027) * t + 1.421413741) * t
             - 0.284496736) * t + 0.254829592) * t
    erf_z = sgn * (1.0 - poly * jnp.exp(-az * az))
    return 0.5 * x_f32 * (1.0 + erf_z)


def _pick_token_tile(n, cap=512):
    for t in (cap, 256, 128, 64, 32, 16, 8):
        if t <= n and n % t == 0:
            return t
    return n


# ----------------------------------------------------------------------------------------------
# Kernel 1: x1 = x + Attention(LayerNorm1(x))          grid = (B, num_heads), heads = reduction
# ----------------------------------------------------------------------------------------------
def _attn_block_kernel(x_ref, g1_ref, b1_ref, wqkv_ref, wp_ref, bp_ref,
                       o_ref, xn_ref, acc_ref, *, eps):
    h = pl.program_id(1)
    num_heads = pl.num_programs(1)
    dtype = xn_ref.dtype

    @pl.when(h == 0)
    def _():
        # LayerNorm once per batch tile (f32 math), stored in the MXU-feed dtype.
        xn = _layernorm_f32(x_ref[0].astype(jnp.float32),
                            g1_ref[...].astype(jnp.float32),
                            b1_ref[...].astype(jnp.float32), eps)
        xn_ref[...] = xn.astype(dtype)

    xn = xn_ref[...]                       # (N, C), native dtype -> bf16 MXU when input is bf16
    w_qkv = wqkv_ref[h]                    # (C, 3*Dh) resident weight, head-indexed in-kernel
    dh = w_qkv.shape[-1] // 3

    # Single fused projection for this head (softmax scale is pre-folded into the Q columns).
    qkv = jnp.dot(xn, w_qkv, preferred_element_type=jnp.float32)       # (N, 3*Dh) f32 acc
    q = qkv[:, :dh].astype(dtype)
    k = qkv[:, dh:2 * dh].astype(dtype)
    v = qkv[:, 2 * dh:].astype(dtype)

    # Q @ K^T without materializing a transpose: contract last dims of both operands
    # (MXU transposed-RHS form, no XLU vxpose).
    s = lax.dot_general(q, k, (((1,), (1,)), ((), ())),
                        preferred_element_type=jnp.float32)            # (N, N)

    # Numerically stable softmax; denominator reciprocal on the EUP (+1 Newton step, (N,1) only).
    # Normalization is folded into the (N, Dh) output rather than the (N, N) probabilities.
    m = jnp.max(s, axis=-1, keepdims=True)
    e = jnp.exp(s - m)
    denom = jnp.sum(e, axis=-1, keepdims=True)
    r = pl.reciprocal(denom, approx=True)
    r = r * (2.0 - denom * r)

    o_h = jnp.dot(e.astype(dtype), v, preferred_element_type=jnp.float32)    # (N, Dh) f32
    o_h = o_h * r                                                            # softmax normalize
    # This head's slice of the output projection: o_h @ Wp[h*Dh:(h+1)*Dh, :].
    contrib = jnp.dot(o_h.astype(dtype), wp_ref[h],
                      preferred_element_type=jnp.float32)                    # (N, C)

    @pl.when(h == 0)
    def _():
        acc_ref[...] = contrib              # first head stores directly (no zero + add)

    @pl.when(h > 0)
    def _():
        acc_ref[...] += contrib

    @pl.when(h == num_heads - 1)
    def _():
        # Bias + residual + downcast once -> single lane-dense (N, C) store.
        y = x_ref[0].astype(jnp.float32) + acc_ref[...] + bp_ref[...].astype(jnp.float32)
        o_ref[0] = y.astype(o_ref.dtype)


def _attn_block(x, g1, b1, wqkv_h, wp_h, bp, *, eps):
    B, N, C = x.shape
    H, _, three_dh = wqkv_h.shape
    dh = three_dh // 3
    kernel = functools.partial(_attn_block_kernel, eps=eps)
    return pl.pallas_call(
        kernel,
        out_shape=jax.ShapeDtypeStruct((B, N, C), x.dtype),
        grid_spec=pltpu.PrefetchScalarGridSpec(
            num_scalar_prefetch=0,
            grid=(B, H),
            in_specs=[
                pl.BlockSpec((1, N, C), lambda b, h: (b, 0, 0)),          # x (LN input + residual)
                pl.BlockSpec((1, C), lambda b, h: (0, 0)),                # LN1 gamma
                pl.BlockSpec((1, C), lambda b, h: (0, 0)),                # LN1 beta
                # Resident weights: full-array blocks + constant index_map -> DMA'd once per
                # pallas_call (not per (b, h) step); head-indexed inside the kernel.
                pl.BlockSpec((H, C, three_dh), lambda b, h: (0, 0, 0)),   # fused per-head Wqkv
                pl.BlockSpec((H, dh, C), lambda b, h: (0, 0, 0)),         # per-head Wproj rows
                pl.BlockSpec((1, C), lambda b, h: (0, 0)),                # proj bias
            ],
            out_specs=pl.BlockSpec((1, N, C), lambda b, h: (b, 0, 0)),
            scratch_shapes=[
                pltpu.VMEM((N, C), x.dtype),       # LN1(x), MXU-feed dtype
                pltpu.VMEM((N, C), jnp.float32),   # output-projection accumulator
            ],
        ),
        compiler_params=pltpu.CompilerParams(
            dimension_semantics=("parallel", "arbitrary"),
            vmem_limit_bytes=_VMEM_LIMIT),
    )(x, g1, b1, wqkv_h, wp_h, bp)


# ----------------------------------------------------------------------------------------------
# Kernel 2: x2 = x1 + MLP(LayerNorm2(x1))               grid = (B, N/tn), all axes parallel
# ----------------------------------------------------------------------------------------------
def _mlp_block_kernel(x_ref, g2_ref, b2_ref, w1_ref, bb1_ref, w2_ref, bb2_ref, o_ref, *, eps):
    x = x_ref[0]                                                       # (tn, C), native dtype
    x32 = x.astype(jnp.float32)
    xn = _layernorm_f32(x32, g2_ref[...].astype(jnp.float32),
                        b2_ref[...].astype(jnp.float32), eps).astype(x.dtype)

    h = jnp.dot(xn, w1_ref[...], preferred_element_type=jnp.float32)
    h = _gelu_exact(h + bb1_ref[...].astype(jnp.float32))              # (tn, Hd) f32
    y = jnp.dot(h.astype(x.dtype), w2_ref[...], preferred_element_type=jnp.float32)
    y = y + bb2_ref[...].astype(jnp.float32)
    o_ref[0] = (x32 + y).astype(o_ref.dtype)                           # residual, one dense store


def _mlp_block(x, g2, b2, w1, bb1, w2, bb2, *, eps):
    B, N, C = x.shape
    Hd = w1.shape[1]
    tn = _pick_token_tile(N)
    kernel = functools.partial(_mlp_block_kernel, eps=eps)
    return pl.pallas_call(
        kernel,
        out_shape=jax.ShapeDtypeStruct((B, N, C), x.dtype),
        grid_spec=pltpu.PrefetchScalarGridSpec(
            num_scalar_prefetch=0,
            grid=(B, N // tn),
            in_specs=[
                pl.BlockSpec((1, tn, C), lambda b, t: (b, t, 0)),   # x1 tile
                pl.BlockSpec((1, C), lambda b, t: (0, 0)),          # LN2 gamma
                pl.BlockSpec((1, C), lambda b, t: (0, 0)),          # LN2 beta
                pl.BlockSpec((C, Hd), lambda b, t: (0, 0)),         # fc1 weight (resident)
                pl.BlockSpec((1, Hd), lambda b, t: (0, 0)),         # fc1 bias
                pl.BlockSpec((Hd, C), lambda b, t: (0, 0)),         # fc2 weight (resident)
                pl.BlockSpec((1, C), lambda b, t: (0, 0)),          # fc2 bias
            ],
            out_specs=pl.BlockSpec((1, tn, C), lambda b, t: (b, t, 0)),
        ),
        compiler_params=pltpu.CompilerParams(
            dimension_semantics=("parallel", "parallel"),
            vmem_limit_bytes=_VMEM_LIMIT),
    )(x, g2, b2, w1, bb1, w2, bb2)


# ----------------------------------------------------------------------------------------------
# Weight preparation (do once at load time, NOT per forward call)
# ----------------------------------------------------------------------------------------------
def prepare_block_params(params, *, num_heads):
    """Head-major weight layout + softmax-scale fold.  Call once at weight-load time.

    Linear weights are stored pre-transposed (in_features, out_features).
      wqkv_h[h] = [Wq[:, h*Dh:(h+1)*Dh] * Dh^-0.5 | Wk[:, ...] | Wv[:, ...]]  -> (H, C, 3*Dh)
      wp_h[h]   =  Wp[h*Dh:(h+1)*Dh, :]                                        -> (H, Dh, C)
    For bf16 deployment, cast params (and x) to bf16 before calling this.
    """
    C = params["wq_t"].shape[0]
    assert C % num_heads == 0
    dh = C // num_heads
    scale = dh ** (-0.5)
    Hd = params["w1_t"].shape[1]

    def heads_cols(w):
        return w.reshape(C, num_heads, dh).transpose(1, 0, 2)

    wqkv_h = jnp.concatenate(
        [heads_cols(params["wq_t"]) * scale,      # softmax scale folded into Q columns
         heads_cols(params["wk_t"]),
         heads_cols(params["wv_t"])],
        axis=-1)
    return dict(
        ln1_g=params["ln1_g"].reshape(1, C), ln1_b=params["ln1_b"].reshape(1, C),
        wqkv_h=wqkv_h,
        wp_h=params["wp_t"].reshape(num_heads, dh, C),
        bp=params["bp"].reshape(1, C),
        ln2_g=params["ln2_g"].reshape(1, C), ln2_b=params["ln2_b"].reshape(1, C),
        w1_t=params["w1_t"], b1=params["b1"].reshape(1, Hd),
        w2_t=params["w2_t"], b2=params["b2"].reshape(1, C),
    )


# ----------------------------------------------------------------------------------------------
# Full block forward
# ----------------------------------------------------------------------------------------------
def block_spt_seq_forward(x, prep, *, eps=_LN_EPS):
    """x: (B, N, C); prep: output of prepare_block_params."""
    x1 = _attn_block(x, prep["ln1_g"], prep["ln1_b"],
                     prep["wqkv_h"], prep["wp_h"], prep["bp"], eps=eps)
    x2 = _mlp_block(x1, prep["ln2_g"], prep["ln2_b"],
                    prep["w1_t"], prep["b1"], prep["w2_t"], prep["b2"], eps=eps)
    return x2


# ----------------------------------------------------------------------------------------------
# Plain-JAX reference mirroring the PyTorch forward (eval mode, structured_list all False)
# ----------------------------------------------------------------------------------------------
def _reference(x, p, *, num_heads, eps=_LN_EPS):
    B, N, C = x.shape
    dh = C // num_heads
    scale = dh ** (-0.5)
    xf = x.astype(jnp.float32)

    def ln(v, g, b):
        mu = v.mean(-1, keepdims=True)
        var = ((v - mu) ** 2).mean(-1, keepdims=True)
        return (v - mu) * lax.rsqrt(var + eps) * g + b

    def split_heads(t):
        return t.reshape(B, N, num_heads, dh).transpose(0, 2, 1, 3)

    xn = ln(xf, p["ln1_g"], p["ln1_b"])
    q = split_heads(xn @ p["wq_t"])
    k = split_heads(xn @ p["wk_t"])
    v = split_heads(xn @ p["wv_t"])
    attn = jax.nn.softmax((q @ jnp.swapaxes(k, -2, -1)) * scale, axis=-1)
    o = (attn @ v).transpose(0, 2, 1, 3).reshape(B, N, C)
    x1 = xf + o @ p["wp_t"] + p["bp"]

    xn2 = ln(x1, p["ln2_g"], p["ln2_b"])
    h = jax.nn.gelu(xn2 @ p["w1_t"] + p["b1"], approximate=False)
    x2 = x1 + h @ p["w2_t"] + p["b2"]
    return x2.astype(x.dtype)


if __name__ == "__main__":
    B, N, C = 2, 16, 256
    num_heads = 2                  # head_dim = 128 -> lane-aligned per-head q/k/v splits
    Hd = 4 * C                     # mlp_ratio = 4.0

    key = jax.random.PRNGKey(0)
    ks = jax.random.split(key, 14)

    def uni(k, shape, fan_in):
        bound = 1.0 / math.sqrt(fan_in)
        return jax.random.uniform(k, shape, jnp.float32, -bound, bound)

    x = jax.random.normal(ks[0], (B, N, C), dtype=jnp.float32)

    params = dict(
        ln1_g=jnp.ones((C,), jnp.float32) + 0.05 * jax.random.normal(ks[1], (C,)),
        ln1_b=0.05 * jax.random.normal(ks[2], (C,)),
        wq_t=uni(ks[3], (C, C), C),     # nn.Linear weights stored pre-transposed (in, out)
        wk_t=uni(ks[4], (C, C), C),
        wv_t=uni(ks[5], (C, C), C),
        wp_t=uni(ks[6], (C, C), C),
        bp=uni(ks[7], (C,), C),
        ln2_g=jnp.ones((C,), jnp.float32) + 0.05 * jax.random.normal(ks[8], (C,)),
        ln2_b=0.05 * jax.random.normal(ks[9], (C,)),
        w1_t=uni(ks[10], (C, Hd), C),
        b1=uni(ks[11], (Hd,), C),
        w2_t=uni(ks[12], (Hd, C), Hd),
        b2=uni(ks[13], (C,), Hd),
    )

    # Weight layout / scale fold done ONCE at load time (not per forward call).
    prep = prepare_block_params(params, num_heads=num_heads)

    out = block_spt_seq_forward(x, prep)
    out = jax.block_until_ready(out)

    ref = _reference(x, params, num_heads=num_heads)
    assert out.shape == (B, N, C)
    max_err = jnp.max(jnp.abs(out - ref))
    # Slightly loose tolerance: EUP approx-reciprocal (+Newton) softmax denom / erf-poly divide.
    assert jnp.allclose(out, ref, atol=2e-3, rtol=2e-3), f"max abs err = {max_err}"

    print("KERNEL_OK")
</pallas_src>

<mosaic_0001>
module attributes {stable_mosaic.version = 11 : i64} {
  func.func @_attn_block_kernel(%arg0: i32, %arg1: i32, %arg2: memref<1x16x256xf32, #tpu.memory_space<vmem>>, %arg3: memref<1x256xf32, #tpu.memory_space<vmem>>, %arg4: memref<1x256xf32, #tpu.memory_space<vmem>>, %arg5: memref<2x256x384xf32, #tpu.memory_space<vmem>>, %arg6: memref<2x128x256xf32, #tpu.memory_space<vmem>>, %arg7: memref<1x256xf32, #tpu.memory_space<vmem>>, %arg8: memref<1x16x256xf32, #tpu.memory_space<vmem>>, %arg9: memref<16x256xf32, #tpu.memory_space<vmem>>, %arg10: memref<16x256xf32, #tpu.memory_space<vmem>>) attributes {dimension_semantics = [#tpu.dimension_semantics<parallel>, #tpu.dimension_semantics<arbitrary>], iteration_bounds = array<i64: 2, 2>, scalar_prefetch = 0 : i64, scratch_operands = 2 : i64, tpu.core_type = #tpu.core_type<tc>, window_params = [{transform_indices = @transform_0, window_bounds = array<i64: 1, 16, 256>}, {pipeline_mode = #tpu.pipeline_mode<synchronous>, transform_indices = @transform_1, window_bounds = array<i64: 1, 256>}, {pipeline_mode = #tpu.pipeline_mode<synchronous>, transform_indices = @transform_2, window_bounds = array<i64: 1, 256>}, {pipeline_mode = #tpu.pipeline_mode<synchronous>, transform_indices = @transform_3, window_bounds = array<i64: 2, 256, 384>}, {pipeline_mode = #tpu.pipeline_mode<synchronous>, transform_indices = @transform_4, window_bounds = array<i64: 2, 128, 256>}, {pipeline_mode = #tpu.pipeline_mode<synchronous>, transform_indices = @transform_5, window_bounds = array<i64: 1, 256>}, {transform_indices = @transform_6, window_bounds = array<i64: 1, 16, 256>}]} {
    %c0_i32 = arith.constant 0 : i32
    %0 = arith.cmpi eq, %arg1, %c0_i32 : i32
    %1 = arith.extui %0 : i1 to i32
    %c0_i32_0 = arith.constant 0 : i32
    %2 = arith.cmpi ne, %1, %c0_i32_0 : i32
    scf.if %2 {
      %c0_17 = arith.constant 0 : index
      %c0_18 = arith.constant 0 : index
      %c0_19 = arith.constant 0 : index
      %40 = vector.load %arg2[%c0_17, %c0_18, %c0_19] : memref<1x16x256xf32, #tpu.memory_space<vmem>>, vector<1x16x256xf32>
      %41 = vector.shape_cast %40 : vector<1x16x256xf32> to vector<16x256xf32>
      %c0_20 = arith.constant 0 : index
      %c0_21 = arith.constant 0 : index
      %42 = vector.load %arg3[%c0_20, %c0_21] : memref<1x256xf32, #tpu.memory_space<vmem>>, vector<1x256xf32>
      %c0_22 = arith.constant 0 : index
      %c0_23 = arith.constant 0 : index
      %43 = vector.load %arg4[%c0_22, %c0_23] : memref<1x256xf32, #tpu.memory_space<vmem>>, vector<1x256xf32>
      %cst_24 = arith.constant dense<0.000000e+00> : vector<16xf32>
      %44 = vector.multi_reduction <add>, %41, %cst_24 [1] : vector<16x256xf32> to vector<16xf32>
      %45 = vector.shape_cast %44 : vector<16xf32> to vector<16x1xf32>
      %cst_25 = arith.constant 2.560000e+02 : f32
      %46 = vector.broadcast %cst_25 : f32 to vector<16x1xf32>
      %47 = arith.divf %45, %46 : vector<16x1xf32>
      %48 = vector.broadcast %47 : vector<16x1xf32> to vector<16x256xf32>
      %49 = arith.subf %41, %48 : vector<16x256xf32>
      %50 = arith.mulf %49, %49 : vector<16x256xf32>
      %cst_26 = arith.constant dense<0.000000e+00> : vector<16xf32>
      %51 = vector.multi_reduction <add>, %50, %cst_26 [1] : vector<16x256xf32> to vector<16xf32>
      %52 = vector.shape_cast %51 : vector<16xf32> to vector<16x1xf32>
      %cst_27 = arith.constant 2.560000e+02 : f32
      %53 = vector.broadcast %cst_27 : f32 to vector<16x1xf32>
      %54 = arith.divf %52, %53 : vector<16x1xf32>
      %cst_28 = arith.constant 9.99999974E-6 : f32
      %55 = vector.broadcast %cst_28 : f32 to vector<16x1xf32>
      %56 = arith.addf %54, %55 : vector<16x1xf32>
      %57 = math.rsqrt %56 : vector<16x1xf32>
      %58 = vector.broadcast %57 : vector<16x1xf32> to vector<16x256xf32>
      %59 = arith.mulf %49, %58 : vector<16x256xf32>
      %60 = vector.broadcast %42 : vector<1x256xf32> to vector<16x256xf32>
      %61 = arith.mulf %59, %60 : vector<16x256xf32>
      %62 = vector.broadcast %43 : vector<1x256xf32> to vector<16x256xf32>
      %63 = arith.addf %61, %62 : vector<16x256xf32>
      %c0_29 = arith.constant 0 : index
      %c0_30 = arith.constant 0 : index
      %64 = vector.load %arg9[%c0_29, %c0_30] : memref<16x256xf32, #tpu.memory_space<vmem>>, vector<16x256xf32>
      tpu.vector_store %arg9[%c0_29, %c0_30], %63 {strides = array<i32>} : memref<16x256xf32, #tpu.memory_space<vmem>>, vector<16x256xf32>,
    } else {
    }
    %c0 = arith.constant 0 : index
    %c0_1 = arith.constant 0 : index
    %3 = vector.load %arg9[%c0, %c0_1] : memref<16x256xf32, #tpu.memory_space<vmem>>, vector<16x256xf32>
    %4 = arith.index_cast %arg1 : i32 to index
    %c0_2 = arith.constant 0 : index
    %c0_3 = arith.constant 0 : index
    %5 = vector.load %arg5[%4, %c0_2, %c0_3] : memref<2x256x384xf32, #tpu.memory_space<vmem>>, vector<1x256x384xf32>
    %6 = vector.shape_cast %5 : vector<1x256x384xf32> to vector<256x384xf32>
    %cst = arith.constant dense<0.000000e+00> : vector<16x384xf32>
    %7 = tpu.matmul %3, %6, %cst {dimension_numbers = #tpu.dot_dimension_numbers<[1], [0], [0], [1], [0, 0, 1, 1], [], []>} : vector<16x256xf32>, vector<256x384xf32>, vector<16x384xf32> -> vector<16x384xf32>
    %8 = vector.extract_strided_slice %7 {offsets = [0, 0], sizes = [16, 128], strides = [1, 1]} : vector<16x384xf32> to vector<16x128xf32>
    %9 = vector.extract_strided_slice %7 {offsets = [0, 128], sizes = [16, 128], strides = [1, 1]} : vector<16x384xf32> to vector<16x128xf32>
    %10 = vector.extract_strided_slice %7 {offsets = [0, 256], sizes = [16, 128], strides = [1, 1]} : vector<16x384xf32> to vector<16x128xf32>
    %cst_4 = arith.constant dense<0.000000e+00> : vector<16x16xf32>
    %11 = tpu.matmul %8, %9, %cst_4 {dimension_numbers = #tpu.dot_dimension_numbers<[1], [1], [0], [0], [0, 0, 1, 0], [], []>} : vector<16x128xf32>, vector<16x128xf32>, vector<16x16xf32> -> vector<16x16xf32>
    %cst_5 = arith.constant dense<0xFF800000> : vector<16xf32>
    %12 = vector.multi_reduction <maximumf>, %11, %cst_5 [1] : vector<16x16xf32> to vector<16xf32>
    %13 = vector.shape_cast %12 : vector<16xf32> to vector<16x1xf32>
    %14 = vector.broadcast %13 : vector<16x1xf32> to vector<16x16xf32>
    %15 = arith.subf %11, %14 : vector<16x16xf32>
    %16 = math.exp %15 : vector<16x16xf32>
    %cst_6 = arith.constant dense<0.000000e+00> : vector<16xf32>
    %17 = vector.multi_reduction <add>, %16, %cst_6 [1] : vector<16x16xf32> to vector<16xf32>
    %18 = vector.shape_cast %17 : vector<16xf32> to vector<16x1xf32>
    %19 = tpu.reciprocal %18 {approx = true} : vector<16x1xf32> -> vector<16x1xf32>
    %20 = arith.mulf %18, %19 : vector<16x1xf32>
    %cst_7 = arith.constant 2.000000e+00 : f32
    %21 = vector.broadcast %cst_7 : f32 to vector<16x1xf32>
    %22 = arith.subf %21, %20 : vector<16x1xf32>
    %23 = arith.mulf %19, %22 : vector<16x1xf32>
    %cst_8 = arith.constant dense<0.000000e+00> : vector<16x128xf32>
    %24 = tpu.matmul %16, %10, %cst_8 {dimension_numbers = #tpu.dot_dimension_numbers<[1], [0], [0], [1], [0, 0, 1, 1], [], []>} : vector<16x16xf32>, vector<16x128xf32>, vector<16x128xf32> -> vector<16x128xf32>
    %25 = vector.broadcast %23 : vector<16x1xf32> to vector<16x128xf32>
    %26 = arith.mulf %24, %25 : vector<16x128xf32>
    %27 = arith.index_cast %arg1 : i32 to index
    %c0_9 = arith.constant 0 : index
    %c0_10 = arith.constant 0 : index
    %28 = vector.load %arg6[%27, %c0_9, %c0_10] : memref<2x128x256xf32, #tpu.memory_space<vmem>>, vector<1x128x256xf32>
    %29 = vector.shape_cast %28 : vector<1x128x256xf32> to vector<128x256xf32>
    %cst_11 = arith.constant dense<0.000000e+00> : vector<16x256xf32>
    %30 = tpu.matmul %26, %29, %cst_11 {dimension_numbers = #tpu.dot_dimension_numbers<[1], [0], [0], [1], [0, 0, 1, 1], [], []>} : vector<16x128xf32>, vector<128x256xf32>, vector<16x256xf32> -> vector<16x256xf32>
    %c0_i32_12 = arith.constant 0 : i32
    %31 = arith.cmpi eq, %arg1, %c0_i32_12 : i32
    %32 = arith.extui %31 : i1 to i32
    %c0_i32_13 = arith.constant 0 : i32
    %33 = arith.cmpi ne, %32, %c0_i32_13 : i32
    scf.if %33 {
      %c0_17 = arith.constant 0 : index
      %c0_18 = arith.constant 0 : index
      %40 = vector.load %arg10[%c0_17, %c0_18] : memref<16x256xf32, #tpu.memory_space<vmem>>, vector<16x256xf32>
      tpu.vector_store %arg10[%c0_17, %c0_18], %30 {strides = array<i32>} : memref<16x256xf32, #tpu.memory_space<vmem>>, vector<16x256xf32>,
    } else {
    }
    %c0_i32_14 = arith.constant 0 : i32
    %34 = arith.cmpi sgt, %arg1, %c0_i32_14 : i32
    %35 = arith.extui %34 : i1 to i32
    %c0_i32_15 = arith.constant 0 : i32
    %36 = arith.cmpi ne, %35, %c0_i32_15 : i32
    scf.if %36 {
      %c0_17 = arith.constant 0 : index
      %c0_18 = arith.constant 0 : index
      %40 = vector.load %arg10[%c0_17, %c0_18] : memref<16x256xf32, #tpu.memory_space<vmem>>, vector<16x256xf32>
      %41 = arith.addf %40, %30 : vector<16x256xf32>
      %c0_19 = arith.constant 0 : index
      %c0_20 = arith.constant 0 : index
      %42 = vector.load %arg10[%c0_19, %c0_20] : memref<16x256xf32, #tpu.memory_space<vmem>>, vector<16x256xf32>
      tpu.vector_store %arg10[%c0_19, %c0_20], %41 {strides = array<i32>} : memref<16x256xf32, #tpu.memory_space<vmem>>, vector<16x256xf32>,
    } else {
    }
    %c1_i32 = arith.constant 1 : i32
    %37 = arith.cmpi eq, %arg1, %c1_i32 : i32
    %38 = arith.extui %37 : i1 to i32
    %c0_i32_16 = arith.constant 0 : i32
    %39 = arith.cmpi ne, %38, %c0_i32_16 : i32
    scf.if %39 {
      %c0_17 = arith.constant 0 : index
      %c0_18 = arith.constant 0 : index
      %c0_19 = arith.constant 0 : index
      %40 = vector.load %arg2[%c0_17, %c0_18, %c0_19] : memref<1x16x256xf32, #tpu.memory_space<vmem>>, vector<1x16x256xf32>
      %41 = vector.shape_cast %40 : vector<1x16x256xf32> to vector<16x256xf32>
      %c0_20 = arith.constant 0 : index
      %c0_21 = arith.constant 0 : index
      %42 = vector.load %arg10[%c0_20, %c0_21] : memref<16x256xf32, #tpu.memory_space<vmem>>, vector<16x256xf32>
      %43 = arith.addf %41, %42 : vector<16x256xf32>
      %c0_22 = arith.constant 0 : index
      %c0_23 = arith.constant 0 : index
      %44 = vector.load %arg7[%c0_22, %c0_23] : memref<1x256xf32, #tpu.memory_space<vmem>>, vector<1x256xf32>
      %45 = vector.broadcast %44 : vector<1x256xf32> to vector<16x256xf32>
      %46 = arith.addf %43, %45 : vector<16x256xf32>
      %c0_24 = arith.constant 0 : index
      %c0_25 = arith.constant 0 : index
      %c0_26 = arith.constant 0 : index
      %47 = vector.load %arg8[%c0_24, %c0_25, %c0_26] : memref<1x16x256xf32, #tpu.memory_space<vmem>>, vector<1x16x256xf32>
      %48 = vector.shape_cast %47 : vector<1x16x256xf32> to vector<16x256xf32>
      %49 = vector.shape_cast %46 : vector<16x256xf32> to vector<1x16x256xf32>
      tpu.vector_store %arg8[%c0_24, %c0_25, %c0_26], %49 {strides = array<i32>} : memref<1x16x256xf32, #tpu.memory_space<vmem>>, vector<1x16x256xf32>,
    } else {
    }
    return
  }
  func.func @transform_0(%arg0: i32, %arg1: i32) -> (i32, i32, i32) {
    %c0_i32 = arith.constant 0 : i32
    %c0_i32_0 = arith.constant 0 : i32
    %c0_i32_1 = arith.constant 0 : i32
    return %arg0, %c0_i32, %c0_i32_0 : i32, i32, i32
  }
  func.func @transform_1(%arg0: i32, %arg1: i32) -> (i32, i32) {
    %c0_i32 = arith.constant 0 : i32
    %c0_i32_0 = arith.constant 0 : i32
    %c0_i32_1 = arith.constant 0 : i32
    return %c0_i32, %c0_i32_0 : i32, i32
  }
  func.func @transform_2(%arg0: i32, %arg1: i32) -> (i32, i32) {
    %c0_i32 = arith.constant 0 : i32
    %c0_i32_0 = arith.constant 0 : i32
    %c0_i32_1 = arith.constant 0 : i32
    return %c0_i32, %c0_i32_0 : i32, i32
  }
  func.func @transform_3(%arg0: i32, %arg1: i32) -> (i32, i32, i32) {
    %c0_i32 = arith.constant 0 : i32
    %c0_i32_0 = arith.constant 0 : i32
    %c0_i32_1 = arith.constant 0 : i32
    %c0_i32_2 = arith.constant 0 : i32
    return %c0_i32, %c0_i32_0, %c0_i32_1 : i32, i32, i32
  }
  func.func @transform_4(%arg0: i32, %arg1: i32) -> (i32, i32, i32) {
    %c0_i32 = arith.constant 0 : i32
    %c0_i32_0 = arith.constant 0 : i32
    %c0_i32_1 = arith.constant 0 : i32
    %c0_i32_2 = arith.constant 0 : i32
    return %c0_i32, %c0_i32_0, %c0_i32_1 : i32, i32, i32
  }
  func.func @transform_5(%arg0: i32, %arg1: i32) -> (i32, i32) {
    %c0_i32 = arith.constant 0 : i32
    %c0_i32_0 = arith.constant 0 : i32
    %c0_i32_1 = arith.constant 0 : i32
    return %c0_i32, %c0_i32_0 : i32, i32
  }
  func.func @transform_6(%arg0: i32, %arg1: i32) -> (i32, i32, i32) {
    %c0_i32 = arith.constant 0 : i32
    %c0_i32_0 = arith.constant 0 : i32
    %c0_i32_1 = arith.constant 0 : i32
    return %arg0, %c0_i32, %c0_i32_0 : i32, i32, i32
  }
}

</mosaic_0001>

<llo_original>
// kernel: tpu_custom_call.1
$region0: #{tpu_custom_call.1}
  #allocation0 [shape = 'u32[]', space=smem, size = 0x4, offset = 0x4, fixed_abs, tag = 'smem constant byte address 0x4 - core index']
  #allocation1 [shape = 'u32[144,128]{1,0:T(1,128)}', space=vmem, size = 0x12000, scoped, tag = 'internal scratch']
  #allocation2 [shape = 'f32[16,256]{1,0:T(8,128)}', space=vmem, size = 0x4000, scoped, tag = 'scratch operand']
  #allocation3 [shape = 'f32[16,256]{1,0:T(8,128)}', space=vmem, size = 0x4000, scoped, tag = 'scratch operand']
  %s0 = inlined_call_operand.hbm [shape: f32[2,16,256], index: 0, kind: input, shape index: {}]
  %s1 = inlined_call_operand.vmem [shape: f32[1,256], index: 1, kind: input, shape index: {}]
  %s2 = inlined_call_operand.vmem [shape: f32[1,256], index: 2, kind: input, shape index: {}]
  %s3 = inlined_call_operand.hbm [shape: f32[2,256,384], index: 3, kind: input, shape index: {}]
  %s4 = inlined_call_operand.hbm [shape: f32[2,128,256], index: 4, kind: input, shape index: {}]
  %s5 = inlined_call_operand.vmem [shape: f32[1,256], index: 5, kind: input, shape index: {}]
  %s6 = inlined_call_operand.hbm [shape: f32[2,16,256], index: 6, kind: output, shape index: {}]
  %s7 = sld [smem:[#allocation0]]
  $region85: #{tpu_custom_call.1} parent=0
    _
  %s9 = ssub.s32 1, %s7
  %s10 = scalar_select 0, %s9, %s7
  $region1: #{tpu_custom_call.1} parent=0
    #allocation4 [shape = 'u8[32768]{0}', space=vmem, size = 0x8000, scoped, tag = 'input window, operand 0']
    #allocation5 [shape = 's32[2]{0}', space=sflag, size = 0x8, scoped, tag = 'scoped memory for tpu_custom_call.1']
    #allocation6 [shape = 's32[2]{0}', space=sflag, size = 0x8, scoped, tag = 'scoped memory for tpu_custom_call.1']
    #allocation7 [shape = 'u8[786432]{0}', space=vmem, size = 0xc0000, scoped, tag = 'input window, operand 3, single buffered']
    #allocation8 [shape = 's32[1]{0}', space=sflag, size = 0x4, scoped, tag = 'scoped memory for tpu_custom_call.1']
    #allocation9 [shape = 'u8[262144]{0}', space=vmem, size = 0x40000, scoped, tag = 'input window, operand 4, single buffered']
    #allocation10 [shape = 'u8[32768]{0}', space=vmem, size = 0x8000, scoped, tag = 'output window, operand 0']
    %11 = vsyncpa [#allocation5], 0
    %s12 = scalar_lea.sflag [#allocation5], 1
    %13 = vsyncpa %s12, 0
    %14 = vsyncpa [#allocation8], 0
    %15 = vsyncpa [#allocation6], 0
    %s16 = scalar_lea.sflag [#allocation6], 1
    %17 = vsyncpa %s16, 0
    loop: start=0, step=1, limit=6
    $region2: #{tpu_custom_call.1} parent=1 // loop_pre_header
      _
    $region3: #{tpu_custom_call.1} parent=1 // loop_header
      %s19 = sphi 0, %s23
      %p20 = scmp.ge.s32.totalorder %s19, 6
      %s26 = sphi 0, %s38
      %s27 = sphi 0, %s34
      %s28 = sphi 0, %s26
      %s29 = sphi 0, %s27
      %s30 = sphi 0, %s28
      %s31 = sphi 0, %s29
      %s41 = sphi 0, %s43
      %s44 = sphi 0, %s41
      %s45 = sphi 0, %s44
      %s61 = sphi 0, %s45
      %s65 = sphi 0, %s65
      %s67 = sphi 0, %s65
      %s68 = sphi 0, %s67
      %s82 = sphi 0, %s68
      %s86 = sphi 0, %s86
      %s88 = sphi 0, %s86
      %s89 = sphi 0, %s88
      %s103 = sphi 0, %s89
      %s107 = sphi 0, %s107
      %s109 = sphi 0, %s107
      %s110 = sphi 0, %s109
      %s124 = sphi 0, %s110
      %s128 = sphi 0, %s128
      %s130 = sphi 0, %s128
      %s131 = sphi 0, %s130
      %s145 = sphi 0, %s131
      %s149 = sphi 0, %s149
      %s151 = sphi 0, %s149
      %s152 = sphi 0, %s151
      %s166 = sphi 0, %s152
      %s172 = sphi 0, %s174
      %s175 = sphi 0, %s172
      %s176 = sphi 0, %s175
      %s192 = sphi 0, %s176
    $region4: #{tpu_custom_call.1} parent=1 // loop_header_branch
      %22 = sbr.rel (%p20) target = $region8
    $region5: #{tpu_custom_call.1} parent=1 // loop_body
      %s24 = ssub.s32 %s19, 1
      %s25 = ssub.s32 %s19, 2
      %s32 = sadd.s32 1, %s27
      %p33 = scmp.ge.s32.totalorder %s32, 2
      %s34 = scalar_select %p33, 0, %s32
      %s35 = sadd.s32 1, %s26
      %s36 = scalar_select %p33, %s35, %s26
      %p37 = scmp.ge.s32.totalorder %s36, 2
      %s38 = scalar_select %p37, 0, %s36
      %s39 = ssub.s32 %s26, %s38
      %p40 = scmp.eq.s32.totalorder %s39, 0
      %s42 = sadd.s32 %s41, 1
      %s43 = scalar_select %p40, %s41, %s42
      %p46 = pneg %p40
      %p47 = scmp.eq.s32.totalorder %s19, 3
      %p48 = por %p46, %p47
      %p49 = scmp.ne.s32.totalorder %s41, %s44
      %p50 = scmp.eq.s32.totalorder %s19, 0
      %p51 = por %p49, %p50
      %p52 = scmp.ne.s32.totalorder %s41, %s44
      %p53 = scmp.eq.s32.totalorder %s24, 3
      %p54 = por %p52, %p53
      %p55 = scmp.ne.s32.totalorder %s44, %s45
      %p56 = scmp.eq.s32.totalorder %s24, 0
      %p57 = por %p55, %p56
      %p58 = scmp.ne.s32.totalorder %s44, %s45
      %p59 = scmp.eq.s32.totalorder %s25, 3
      %p60 = por %p58, %p59
      %p62 = scmp.ne.s32.totalorder %s45, %s61
      %p63 = scmp.eq.s32.totalorder %s25, 0
      %p64 = por %p62, %p63
      %s66 = sadd.s32 %s65, 1
      %p69 = scmp.eq.s32.totalorder %s19, 3
      %p70 = scmp.ne.s32.totalorder %s65, %s67
      %p71 = scmp.eq.s32.totalorder %s19, 0
      %p72 = por %p70, %p71
      %p73 = scmp.ne.s32.totalorder %s65, %s67
      %p74 = scmp.eq.s32.totalorder %s24, 3
      %p75 = por %p73, %p74
      %p76 = scmp.ne.s32.totalorder %s67, %s68
      %p77 = scmp.eq.s32.totalorder %s24, 0
      %p78 = por %p76, %p77
      %p79 = scmp.ne.s32.totalorder %s67, %s68
      %p80 = scmp.eq.s32.totalorder %s25, 3
      %p81 = por %p79, %p80
      %p83 = scmp.ne.s32.totalorder %s68, %s82
      %p84 = scmp.eq.s32.totalorder %s25, 0
      %p85 = por %p83, %p84
      %s87 = sadd.s32 %s86, 1
      %p90 = scmp.eq.s32.totalorder %s19, 3
      %p91 = scmp.ne.s32.totalorder %s86, %s88
      %p92 = scmp.eq.s32.totalorder %s19, 0
      %p93 = por %p91, %p92
      %p94 = scmp.ne.s32.totalorder %s86, %s88
      %p95 = scmp.eq.s32.totalorder %s24, 3
      %p96 = por %p94, %p95
      %p97 = scmp.ne.s32.totalorder %s88, %s89
      %p98 = scmp.eq.s32.totalorder %s24, 0
      %p99 = por %p97, %p98
      %p100 = scmp.ne.s32.totalorder %s88, %s89
      %p101 = scmp.eq.s32.totalorder %s25, 3
      %p102 = por %p100, %p101
      %p104 = scmp.ne.s32.totalorder %s89, %s103
      %p105 = scmp.eq.s32.totalorder %s25, 0
      %p106 = por %p104, %p105
      %s108 = sadd.s32 %s107, 1
      %p111 = scmp.eq.s32.totalorder %s19, 3
      %p112 = scmp.ne.s32.totalorder %s107, %s109
      %p113 = scmp.eq.s32.totalorder %s19, 0
      %p114 = por %p112, %p113
      %p115 = scmp.ne.s32.totalorder %s107, %s109
      %p116 = scmp.eq.s32.totalorder %s24, 3
      %p117 = por %p115, %p116
      %p118 = scmp.ne.s32.totalorder %s109, %s110
      %p119 = scmp.eq.s32.totalorder %s24, 0
      %p120 = por %p118, %p119
      %p121 = scmp.ne.s32.totalorder %s109, %s110
      %p122 = scmp.eq.s32.totalorder %s25, 3
      %p123 = por %p121, %p122
      %p125 = scmp.ne.s32.totalorder %s110, %s124
      %p126 = scmp.eq.s32.totalorder %s25, 0
      %p127 = por %p125, %p126
      %s129 = sadd.s32 %s128, 1
      %p132 = scmp.eq.s32.totalorder %s19, 3
      %p133 = scmp.ne.s32.totalorder %s128, %s130
      %p134 = scmp.eq.s32.totalorder %s19, 0
      %p135 = por %p133, %p134
      %p136 = scmp.ne.s32.totalorder %s128, %s130
      %p137 = scmp.eq.s32.totalorder %s24, 3
      %p138 = por %p136, %p137
      %p139 = scmp.ne.s32.totalorder %s130, %s131
      %p140 = scmp.eq.s32.totalorder %s24, 0
      %p141 = por %p139, %p140
      %p142 = scmp.ne.s32.totalorder %s130, %s131
      %p143 = scmp.eq.s32.totalorder %s25, 3
      %p144 = por %p142, %p143
      %p146 = scmp.ne.s32.totalorder %s131, %s145
      %p147 = scmp.eq.s32.totalorder %s25, 0
      %p148 = por %p146, %p147
      %s150 = sadd.s32 %s149, 1
      %p153 = scmp.eq.s32.totalorder %s19, 3
      %p154 = scmp.ne.s32.totalorder %s149, %s151
      %p155 = scmp.eq.s32.totalorder %s19, 0
      %p156 = por %p154, %p155
      %p157 = scmp.ne.s32.totalorder %s149, %s151
      %p158 = scmp.eq.s32.totalorder %s24, 3
      %p159 = por %p157, %p158
      %p160 = scmp.ne.s32.totalorder %s151, %s152
      %p161 = scmp.eq.s32.totalorder %s24, 0
      %p162 = por %p160, %p161
      %p163 = scmp.ne.s32.totalorder %s151, %s152
      %p164 = scmp.eq.s32.totalorder %s25, 3
      %p165 = por %p163, %p164
      %p167 = scmp.ne.s32.totalorder %s152, %s166
      %p168 = scmp.eq.s32.totalorder %s25, 0
      %p169 = por %p167, %p168
      %s170 = ssub.s32 %s26, %s38
      %p171 = scmp.eq.s32.totalorder %s170, 0
      %s173 = sadd.s32 %s172, 1
      %s174 = scalar_select %p171, %s172, %s173
      %p177 = pneg %p171
      %p178 = scmp.eq.s32.totalorder %s19, 3
      %p179 = por %p177, %p178
      %p180 = scmp.ne.s32.totalorder %s172, %s175
      %p181 = scmp.eq.s32.totalorder %s19, 0
      %p182 = por %p180, %p181
      %p183 = scmp.ne.s32.totalorder %s172, %s175
      %p184 = scmp.eq.s32.totalorder %s24, 3
      %p185 = por %p183, %p184
      %p186 = scmp.ne.s32.totalorder %s175, %s176
      %p187 = scmp.eq.s32.totalorder %s24, 0
      %p188 = por %p186, %p187
      %p189 = scmp.ne.s32.totalorder %s175, %s176
      %p190 = scmp.eq.s32.totalorder %s25, 3
      %p191 = por %p189, %p190
      %p193 = scmp.ne.s32.totalorder %s176, %s192
      %p194 = scmp.eq.s32.totalorder %s25, 0
      %p195 = por %p193, %p194
      %p196 = scmp.le.s32.totalorder 1, %s19
      %p197 = scmp.lt.s32.totalorder %s19, 5
      %p198 = pnand %p196, %p197
      %p199 = pneg %p198
      // Predicated region
      $region9: #{tpu_custom_call.1} parent=5 // pred_check
        _
      $region10: #{tpu_custom_call.1} parent=5 // pred_check_branch
        %201 = sbr.rel (%p198) target = $region12
      $region11: #{tpu_custom_call.1} parent=5 // pred_region
        %s202 = ssub.s32 %s19, 1
        // Predicated region
        $region13: #{tpu_custom_call.1} parent=11 // pred_check
          %p203 = pneg %p78
        $region14: #{tpu_custom_call.1} parent=11 // pred_check_branch
          %205 = sbr.rel (%p203) target = $region16
        $region15: #{tpu_custom_call.1} parent=11 // pred_region
          _
        $region16: #{tpu_custom_call.1} parent=11 // pred_fallthru
          _
        // Predicated region
        $region17: #{tpu_custom_call.1} parent=11 // pred_check
          %p206 = pneg %p99
        $region18: #{tpu_custom_call.1} parent=11 // pred_check_branch
          %208 = sbr.rel (%p206) target = $region20
        $region19: #{tpu_custom_call.1} parent=11 // pred_region
          _
        $region20: #{tpu_custom_call.1} parent=11 // pred_fallthru
          _
        // Predicated region
        $region21: #{tpu_custom_call.1} parent=11 // pred_check
          %p209 = pneg %p120
        $region22: #{tpu_custom_call.1} parent=11 // pred_check_branch
          %211 = sbr.rel (%p209) target = $region24
        $region23: #{tpu_custom_call.1} parent=11 // pred_region
          %s213 = ssub.s32 24576, 24576
          %214 = vsyncadd [#allocation8], %s213
          %s215 = sshll.u32 [#allocation7], 4
          %s216 = int_to_ptr.vmem [resolvable:$true] %s215
          %221 = dma.hbm_to_vmem [thread:$0]  %s3, 24576, %s216, [#allocation8], 384, 384, 24
        $region24: #{tpu_custom_call.1} parent=11 // pred_fallthru
          _
        // Predicated region
        $region25: #{tpu_custom_call.1} parent=11 // pred_check
          %p222 = pneg %p141
        $region26: #{tpu_custom_call.1} parent=11 // pred_check_branch
          %224 = sbr.rel (%p222) target = $region28
        $region27: #{tpu_custom_call.1} parent=11 // pred_region
          %s226 = ssub.s32 8192, 8192
          %227 = vsyncadd [#allocation8], %s226
          %s228 = sshll.u32 [#allocation9], 4
          %s229 = int_to_ptr.vmem [resolvable:$true] %s228
          %234 = dma.hbm_to_vmem [thread:$0]  %s4, 8192, %s229, [#allocation8], 256, 256, 16
        $region28: #{tpu_custom_call.1} parent=11 // pred_fallthru
          _
        // Predicated region
        $region29: #{tpu_custom_call.1} parent=11 // pred_check
          %p235 = pneg %p162
        $region30: #{tpu_custom_call.1} parent=11 // pred_check_branch
          %237 = sbr.rel (%p235) target = $region32
        $region31: #{tpu_custom_call.1} parent=11 // pred_region
          _
        $region32: #{tpu_custom_call.1} parent=11 // pred_fallthru
          _
      $region12: #{tpu_custom_call.1} parent=5 // pred_fallthru
        _
      %p238 = scmp.lt.s32.totalorder %s19, 4
      // Predicated region
      $region33: #{tpu_custom_call.1} parent=5 // pred_check
        %p239 = pneg %p238
      $region34: #{tpu_custom_call.1} parent=5 // pred_check_branch
        %241 = sbr.rel (%p239) target = $region36
      $region35: #{tpu_custom_call.1} parent=5 // pred_region
        // Predicated region
        $region37: #{tpu_custom_call.1} parent=35 // pred_check
          %p242 = pneg %p51
        $region38: #{tpu_custom_call.1} parent=35 // pred_check_branch
          %244 = sbr.rel (%p242) target = $region40
        $region39: #{tpu_custom_call.1} parent=35 // pred_region
          %s245 = sand.u32 %s41, 1
          %s246 = scalar_lea.sflag [#allocation5], %s245
          %s247 = sand.u32 %s41, 1
          %s248 = smul.addr %s247, 32
          %s249 = scalar_lea.vmem [#allocation4], %s248
          %s251 = ssub.s32 512, 512
          %252 = vsyncadd %s246, %s251
          %s253 = smul.addr %s26, 4
          %s254 = smul.addr %s253, 128
          %s255 = scalar_lea.hbm %s0, %s254
          %s256 = sshll.u32 %s249, 4
          %s257 = int_to_ptr.vmem [resolvable:$true] %s256
          %262 = dma.hbm_to_vmem [thread:$0]  %s255, 512, %s257, %s246, 256, 256, 16
        $region40: #{tpu_custom_call.1} parent=35 // pred_fallthru
          _
      $region36: #{tpu_custom_call.1} parent=5 // pred_fallthru
        _
      %p263 = scmp.le.s32.totalorder 1, %s19
      %p264 = scmp.lt.s32.totalorder %s19, 5
      %p265 = pnand %p263, %p264
      %p266 = pneg %p265
      // Predicated region
      $region41: #{tpu_custom_call.1} parent=5 // pred_check
        _
      $region42: #{tpu_custom_call.1} parent=5 // pred_check_branch
        %268 = sbr.rel (%p265) target = $region44
      $region43: #{tpu_custom_call.1} parent=5 // pred_region
        %s269 = ssub.s32 %s19, 1
        %s270 = sand.u32 %s44, 1
        %s271 = scalar_lea.sflag [#allocation5], %s270
        %s272 = sand.u32 %s44, 1
        %s273 = smul.addr %s272, 32
        %s274 = scalar_lea.vmem [#allocation4], %s273
        // Predicated region
        $region45: #{tpu_custom_call.1} parent=43 // pred_check
          %p275 = pneg %p57
        $region46: #{tpu_custom_call.1} parent=43 // pred_check_branch
          %277 = sbr.rel (%p275) target = $region48
        $region47: #{tpu_custom_call.1} parent=43 // pred_region
          %278 = dma.done %s271, 512
        $region48: #{tpu_custom_call.1} parent=43 // pred_fallthru
          _
        // Predicated region
        $region49: #{tpu_custom_call.1} parent=43 // pred_check
          %p279 = pneg %p120
        $region50: #{tpu_custom_call.1} parent=43 // pred_check_branch
          %281 = sbr.rel (%p279) target = $region52
        $region51: #{tpu_custom_call.1} parent=43 // pred_region
          %282 = dma.done [#allocation8], 24576
        $region52: #{tpu_custom_call.1} parent=43 // pred_fallthru
          _
        // Predicated region
        $region53: #{tpu_custom_call.1} parent=43 // pred_check
          %p283 = pneg %p141
        $region54: #{tpu_custom_call.1} parent=43 // pred_check_branch
          %285 = sbr.rel (%p283) target = $region56
        $region55: #{tpu_custom_call.1} parent=43 // pred_region
          %286 = dma.done [#allocation8], 8192
        $region56: #{tpu_custom_call.1} parent=43 // pred_fallthru
          _
        %s287 = sand.u32 %s44, 1
        %s288 = scalar_lea.sflag [#allocation5], %s287
        %s289 = sand.u32 %s44, 1
        %s290 = smul.addr %s289, 32
        %s291 = scalar_lea.vmem [#allocation4], %s290
        %p292 = pneg %p57
        %p293 = pneg %p54
        %p294 = pneg %p78
        %p295 = pneg %p75
        %p296 = pneg %p99
        %p297 = pneg %p96
        %p298 = pneg %p120
        %p299 = pneg %p117
        %p300 = pneg %p141
        %p301 = pneg %p138
        %p302 = pneg %p162
        %p303 = pneg %p159
        %p304 = pneg %p188
        %p305 = pneg %p185
        %s306 = sand.u32 %s175, 1
        %s307 = scalar_lea.sflag [#allocation6], %s306
        %s308 = sand.u32 %s175, 1
        %s309 = smul.addr %s308, 32
        %s310 = scalar_lea.vmem [#allocation10], %s309
        %p311 = scmp.eq.s32.totalorder %s29, 0
        // Predicated region
        $region57: #{tpu_custom_call.1} parent=43 // pred_check
          %p312 = pneg %p311
        $region58: #{tpu_custom_call.1} parent=43 // pred_check_branch
          %314 = sbr.rel (%p312) target = $region60
        $region59: #{tpu_custom_call.1} parent=43 // pred_region
          %v315 = vld [vmem:[%s274] sm:$0xff]
          %v316 = vld [vmem:[%s274 + $0x8] sm:$0xff]
          %v317 = vld [vmem:[%s274 + $0x10] sm:$0xff]
          %v318 = vld [vmem:[%s274 + $0x18] sm:$0xff]
          %v319 = vld [vmem:[%s1] sm:$0x3]
          %v320 = vld [vmem:[%s2] sm:$0x3]
          %v321 = vadd.f32 %v315, %v316
          %322 = vadd.xlane.f32.xlu0 %v321
          %v323 = vpop.xlane.xlu0 %322
          %v324 = vadd.f32 %v317, %v318
          %325 = vadd.xlane.f32.xlu0 %v324
          %v326 = vpop.xlane.xlu0 %325
          %v327 = vrcp.pop 256.0
          %v328 = vmul.f32 %v323, %v327
          %v329 = vmul.f32 %v326, %v327
          %v330 = vsub.f32 %v315, %v328
          %v331 = vsub.f32 %v316, %v328
          %v332 = vsub.f32 %v317, %v329
          %v333 = vsub.f32 %v318, %v329
          %v334 = vmul.f32 %v330, %v330
          %v335 = vmul.f32 %v331, %v331
          %v336 = vmul.f32 %v332, %v332
          %v337 = vmul.f32 %v333, %v333
          %v338 = vadd.f32 %v334, %v335
          %339 = vadd.xlane.f32.xlu0 %v338
          %v340 = vpop.xlane.xlu0 %339
          %v341 = vadd.f32 %v336, %v337
          %342 = vadd.xlane.f32.xlu0 %v341
          %v343 = vpop.xlane.xlu0 %342
          %v344 = vmul.f32 %v340, %v327
          %v345 = vmul.f32 %v343, %v327
          %v346 = vadd.f32 %v344, 1e-05
          %v347 = vadd.f32 %v345, 1e-05
          %v348 = vrsqrt.pop %v346
          %v349 = vrsqrt.pop %v347
          %v350 = vmul.f32 %v330, %v348
          %v351 = vmul.f32 %v331, %v348
          %v352 = vmul.f32 %v332, %v349
          %v353 = vmul.f32 %v333, %v349
          %v355 = vlaneseq
          %v356 = vshrl.u32 %v355, 7
          %v357 = vsub.s32 0, %v356
          %v358 = vrot.slane %v319, %v357
          %v359 = vlaneseq
          %v360 = vshrl.u32 %v359, 7
          %v361 = vsub.s32 1, %v360
          %v362 = vrot.slane %v319, %v361
          %v365 = vmul.f32 %v350, %v358
          %v366 = vmul.f32 %v351, %v362
          %v367 = vmul.f32 %v352, %v358
          %v368 = vmul.f32 %v353, %v362
          %v370 = vlaneseq
          %v371 = vshrl.u32 %v370, 7
          %v372 = vsub.s32 0, %v371
          %v373 = vrot.slane %v320, %v372
          %v374 = vlaneseq
          %v375 = vshrl.u32 %v374, 7
          %v376 = vsub.s32 1, %v375
          %v377 = vrot.slane %v320, %v376
          %v380 = vadd.f32 %v365, %v373
          %v381 = vadd.f32 %v366, %v377
          %v382 = vadd.f32 %v367, %v373
          %v383 = vadd.f32 %v368, %v377
          %384 = vst [vmem:[#allocation2] sm:$0xff] %v380
          %385 = vst [vmem:[#allocation2 + $0x8] sm:$0xff] %v381
          %386 = vst [vmem:[#allocation2 + $0x10] sm:$0xff] %v382
          %387 = vst [vmem:[#allocation2 + $0x18] sm:$0xff] %v383
        $region60: #{tpu_custom_call.1} parent=43 // pred_fallthru
          _
        %v388 = vld [vmem:[#allocation2] sm:$0xff]
        %v389 = vld [vmem:[#allocation2 + $0x8] sm:$0xff]
        %v390 = vld [vmem:[#allocation2 + $0x10] sm:$0xff]
        %v391 = vld [vmem:[#allocation2 + $0x18] sm:$0xff]
        %s392 = smul.u32 %s29, 96
        %s393 = smul.addr %s392, 8
        %s394 = scalar_lea.vmem [#allocation7], %s393
        %v395 = vld [vmem:[%s394] sm:$0xff]
        %v396 = vld [vmem:[%s394 + $0x8] sm:$0xff]
        %v397 = vld [vmem:[%s394 + $0x10] sm:$0xff]
        %v398 = vld [vmem:[%s394 + $0x18] sm:$0xff]
        %v399 = vld [vmem:[%s394 + $0x20] sm:$0xff]
        %v400 = vld [vmem:[%s394 + $0x28] sm:$0xff]
        %v401 = vld [vmem:[%s394 + $0x30] sm:$0xff]
        %v402 = vld [vmem:[%s394 + $0x38] sm:$0xff]
        %v403 = vld [vmem:[%s394 + $0x40] sm:$0xff]
        %v404 = vld [vmem:[%s394 + $0x48] sm:$0xff]
        %v405 = vld [vmem:[%s394 + $0x50] sm:$0xff]
        %v406 = vld [vmem:[%s394 + $0x58] sm:$0xff]
        %v407 = vld [vmem:[%s394 + $0x60] sm:$0xff]
        %v408 = vld [vmem:[%s394 + $0x68] sm:$0xff]
        %v409 = vld [vmem:[%s394 + $0x70] sm:$0xff]
        %v410 = vld [vmem:[%s394 + $0x78] sm:$0xff]
        %v411 = vld [vmem:[%s394 + $0x80] sm:$0xff]
        %v412 = vld [vmem:[%s394 + $0x88] sm:$0xff]
        %v413 = vld [vmem:[%s394 + $0x90] sm:$0xff]
        %v414 = vld [vmem:[%s394 + $0x98] sm:$0xff]
        %v415 = vld [vmem:[%s394 + $0xa0] sm:$0xff]
        %v416 = vld [vmem:[%s394 + $0xa8] sm:$0xff]
        %v417 = vld [vmem:[%s394 + $0xb0] sm:$0xff]
        %v418 = vld [vmem:[%s394 + $0xb8] sm:$0xff]
        %v419 = vld [vmem:[%s394 + $0xc0] sm:$0xff]
        %v420 = vld [vmem:[%s394 + $0xc8] sm:$0xff]
        %v421 = vld [vmem:[%s394 + $0xd0] sm:$0xff]
        %v422 = vld [vmem:[%s394 + $0xd8] sm:$0xff]
        %v423 = vld [vmem:[%s394 + $0xe0] sm:$0xff]
        %v424 = vld [vmem:[%s394 + $0xe8] sm:$0xff]
        %v425 = vld [vmem:[%s394 + $0xf0] sm:$0xff]
        %v426 = vld [vmem:[%s394 + $0xf8] sm:$0xff]
        %v427 = vld [vmem:[%s394 + $0x100] sm:$0xff]
        %v428 = vld [vmem:[%s394 + $0x108] sm:$0xff]
        %v429 = vld [vmem:[%s394 + $0x110] sm:$0xff]
        %v430 = vld [vmem:[%s394 + $0x118] sm:$0xff]
        %v431 = vld [vmem:[%s394 + $0x120] sm:$0xff]
        %v432 = vld [vmem:[%s394 + $0x128] sm:$0xff]
        %v433 = vld [vmem:[%s394 + $0x130] sm:$0xff]
        %v434 = vld [vmem:[%s394 + $0x138] sm:$0xff]
        %v435 = vld [vmem:[%s394 + $0x140] sm:$0xff]
        %v436 = vld [vmem:[%s394 + $0x148] sm:$0xff]
        %v437 = vld [vmem:[%s394 + $0x150] sm:$0xff]
        %v438 = vld [vmem:[%s394 + $0x158] sm:$0xff]
        %v439 = vld [vmem:[%s394 + $0x160] sm:$0xff]
        %v440 = vld [vmem:[%s394 + $0x168] sm:$0xff]
        %v441 = vld [vmem:[%s394 + $0x170] sm:$0xff]
        %v442 = vld [vmem:[%s394 + $0x178] sm:$0xff]
        %v443 = vld [vmem:[%s394 + $0x180] sm:$0xff]
        %v444 = vld [vmem:[%s394 + $0x188] sm:$0xff]
        %v445 = vld [vmem:[%s394 + $0x190] sm:$0xff]
        %v446 = vld [vmem:[%s394 + $0x198] sm:$0xff]
        %v447 = vld [vmem:[%s394 + $0x1a0] sm:$0xff]
        %v448 = vld [vmem:[%s394 + $0x1a8] sm:$0xff]
        %v449 = vld [vmem:[%s394 + $0x1b0] sm:$0xff]
        %v450 = vld [vmem:[%s394 + $0x1b8] sm:$0xff]
        %v451 = vld [vmem:[%s394 + $0x1c0] sm:$0xff]
        %v452 = vld [vmem:[%s394 + $0x1c8] sm:$0xff]
        %v453 = vld [vmem:[%s394 + $0x1d0] sm:$0xff]
        %v454 = vld [vmem:[%s394 + $0x1d8] sm:$0xff]
        %v455 = vld [vmem:[%s394 + $0x1e0] sm:$0xff]
        %v456 = vld [vmem:[%s394 + $0x1e8] sm:$0xff]
        %v457 = vld [vmem:[%s394 + $0x1f0] sm:$0xff]
        %v458 = vld [vmem:[%s394 + $0x1f8] sm:$0xff]
        %v459 = vld [vmem:[%s394 + $0x200] sm:$0xff]
        %v460 = vld [vmem:[%s394 + $0x208] sm:$0xff]
        %v461 = vld [vmem:[%s394 + $0x210] sm:$0xff]
        %v462 = vld [vmem:[%s394 + $0x218] sm:$0xff]
        %v463 = vld [vmem:[%s394 + $0x220] sm:$0xff]
        %v464 = vld [vmem:[%s394 + $0x228] sm:$0xff]
        %v465 = vld [vmem:[%s394 + $0x230] sm:$0xff]
        %v466 = vld [vmem:[%s394 + $0x238] sm:$0xff]
        %v467 = vld [vmem:[%s394 + $0x240] sm:$0xff]
        %v468 = vld [vmem:[%s394 + $0x248] sm:$0xff]
        %v469 = vld [vmem:[%s394 + $0x250] sm:$0xff]
        %v470 = vld [vmem:[%s394 + $0x258] sm:$0xff]
        %v471 = vld [vmem:[%s394 + $0x260] sm:$0xff]
        %v472 = vld [vmem:[%s394 + $0x268] sm:$0xff]
        %v473 = vld [vmem:[%s394 + $0x270] sm:$0xff]
        %v474 = vld [vmem:[%s394 + $0x278] sm:$0xff]
        %v475 = vld [vmem:[%s394 + $0x280] sm:$0xff]
        %v476 = vld [vmem:[%s394 + $0x288] sm:$0xff]
        %v477 = vld [vmem:[%s394 + $0x290] sm:$0xff]
        %v478 = vld [vmem:[%s394 + $0x298] sm:$0xff]
        %v479 = vld [vmem:[%s394 + $0x2a0] sm:$0xff]
        %v480 = vld [vmem:[%s394 + $0x2a8] sm:$0xff]
        %v481 = vld [vmem:[%s394 + $0x2b0] sm:$0xff]
        %v482 = vld [vmem:[%s394 + $0x2b8] sm:$0xff]
        %v483 = vld [vmem:[%s394 + $0x2c0] sm:$0xff]
        %v484 = vld [vmem:[%s394 + $0x2c8] sm:$0xff]
        %v485 = vld [vmem:[%s394 + $0x2d0] sm:$0xff]
        %v486 = vld [vmem:[%s394 + $0x2d8] sm:$0xff]
        %v487 = vld [vmem:[%s394 + $0x2e0] sm:$0xff]
        %v488 = vld [vmem:[%s394 + $0x2e8] sm:$0xff]
        %v489 = vld [vmem:[%s394 + $0x2f0] sm:$0xff]
        %v490 = vld [vmem:[%s394 + $0x2f8] sm:$0xff]
        %491 = vmatprep.subr.mxu0 %v396
        %492 = vmatpush1.msra.mxu0 %v395
        %493 = vmatprep.subr.mxu0 %v399
        %494 = vmatpush1.msra.mxu0 %v398
        %495 = vmatprep.subr.mxu0 %v402
        %496 = vmatpush1.msra.mxu0 %v401
        %497 = vmatprep.subr.mxu0 %v405
        %498 = vmatpush1.msra.mxu0 %v404
        %499 = vmatprep.subr.mxu0 %v408
        %500 = vmatpush1.msra.mxu0 %v407
        %501 = vmatprep.subr.mxu0 %v411
        %502 = vmatpush1.msra.mxu0 %v410
        %503 = vmatprep.subr.mxu0 %v414
        %504 = vmatpush1.msra.mxu0 %v413
        %505 = vmatprep.subr.mxu0 %v417
        %506 = vmatpush1.msra.mxu0 %v416
        %507 = vmatprep.subr.mxu0 %v420
        %508 = vmatpush1.msra.mxu0 %v419
        %509 = vmatprep.subr.mxu0 %v423
        %510 = vmatpush1.msra.mxu0 %v422
        %511 = vmatprep.subr.mxu0 %v426
        %512 = vmatpush1.msra.mxu0 %v425
        %513 = vmatprep.subr.mxu0 %v429
        %514 = vmatpush1.msra.mxu0 %v428
        %515 = vmatprep.subr.mxu0 %v432
        %516 = vmatpush1.msra.mxu0 %v431
        %517 = vmatprep.subr.mxu0 %v435
        %518 = vmatpush1.msra.mxu0 %v434
        %519 = vmatprep.subr.mxu0 %v438
        %520 = vmatpush1.msra.mxu0 %v437
        %521 = vmatprep.subr.mxu0 %v441
        %522 = vmatpush1.msra.mxu0 %v440
        %523 = vmatprep.subr.mxu0 %v444
        %524 = vmatpush1.msra.mxu0 %v443
        %525 = vmatprep.subr.mxu0 %v447
        %526 = vmatpush1.msra.mxu0 %v446
        %527 = vmatprep.subr.mxu0 %v450
        %528 = vmatpush1.msra.mxu0 %v449
        %529 = vmatprep.subr.mxu0 %v453
        %530 = vmatpush1.msra.mxu0 %v452
        %531 = vmatprep.subr.mxu0 %v456
        %532 = vmatpush1.msra.mxu0 %v455
        %533 = vmatprep.subr.mxu0 %v459
        %534 = vmatpush1.msra.mxu0 %v458
        %535 = vmatprep.subr.mxu0 %v462
        %536 = vmatpush1.msra.mxu0 %v461
        %537 = vmatprep.subr.mxu0 %v465
        %538 = vmatpush1.msra.mxu0 %v464
        %539 = vmatprep.subr.mxu0 %v468
        %540 = vmatpush1.msra.mxu0 %v467
        %541 = vmatprep.subr.mxu0 %v471
        %542 = vmatpush1.msra.mxu0 %v470
        %543 = vmatprep.subr.mxu0 %v474
        %544 = vmatpush1.msra.mxu0 %v473
        %545 = vmatprep.subr.mxu0 %v477
        %546 = vmatpush1.msra.mxu0 %v476
        %547 = vmatprep.subr.mxu0 %v480
        %548 = vmatpush1.msra.mxu0 %v479
        %549 = vmatprep.subr.mxu0 %v483
        %550 = vmatpush1.msra.mxu0 %v482
        %551 = vmatprep.subr.mxu0 %v486
        %552 = vmatpush1.msra.mxu0 %v485
        %553 = vmatprep.subr.mxu0 %v489
        %554 = vmatpush1.msra.mxu0 %v488
        %555 = vmatprep.mubr.f32.mxu0 %v389
        %556 = vmatmul.mubr.f32.gmra.mrb[0].mxu0 %v388
        %v557 = vpop.f32.mrb[0].mxu0
        %v558 = vadd.f32 0.0, %v557
        %v559 = vpop.f32.mrb[0].mxu0
        %v560 = vadd.f32 0.0, %v559
        %561 = vmatprep.mubr.f32.mxu0 %v391
        %562 = vmatmul.mubr.f32.gmra.mrb[0].mxu0 %v390
        %v563 = vpop.f32.mrb[0].mxu0
        %v564 = vadd.f32 0.0, %v563
        %v565 = vpop.f32.mrb[0].mxu0
        %v566 = vadd.f32 0.0, %v565
        %567 = vdwg.mxu0
        %568 = vmatprep.subr.mxu0 0.0
        %569 = vmatpush1.msra.mxu0 %v397
        %570 = vmatprep.subr.mxu0 0.0
        %571 = vmatpush1.msra.mxu0 %v400
        %572 = vmatprep.subr.mxu0 0.0
        %573 = vmatpush1.msra.mxu0 %v403
        %574 = vmatprep.subr.mxu0 0.0
        %575 = vmatpush1.msra.mxu0 %v406
        %576 = vmatprep.subr.mxu0 0.0
        %577 = vmatpush1.msra.mxu0 %v409
        %578 = vmatprep.subr.mxu0 0.0
        %579 = vmatpush1.msra.mxu0 %v412
        %580 = vmatprep.subr.mxu0 0.0
        %581 = vmatpush1.msra.mxu0 %v415
        %582 = vmatprep.subr.mxu0 0.0
        %583 = vmatpush1.msra.mxu0 %v418
        %584 = vmatprep.subr.mxu0 0.0
        %585 = vmatpush1.msra.mxu0 %v421
        %586 = vmatprep.subr.mxu0 0.0
        %587 = vmatpush1.msra.mxu0 %v424
        %588 = vmatprep.subr.mxu0 0.0
        %589 = vmatpush1.msra.mxu0 %v427
        %590 = vmatprep.subr.mxu0 0.0
        %591 = vmatpush1.msra.mxu0 %v430
        %592 = vmatprep.subr.mxu0 0.0
        %593 = vmatpush1.msra.mxu0 %v433
        %594 = vmatprep.subr.mxu0 0.0
        %595 = vmatpush1.msra.mxu0 %v436
        %596 = vmatprep.subr.mxu0 0.0
        %597 = vmatpush1.msra.mxu0 %v439
        %598 = vmatprep.subr.mxu0 0.0
        %599 = vmatpush1.msra.mxu0 %v442
        %600 = vmatprep.subr.mxu0 0.0
        %601 = vmatpush1.msra.mxu0 %v445
        %602 = vmatprep.subr.mxu0 0.0
        %603 = vmatpush1.msra.mxu0 %v448
        %604 = vmatprep.subr.mxu0 0.0
        %605 = vmatpush1.msra.mxu0 %v451
        %606 = vmatprep.subr.mxu0 0.0
        %607 = vmatpush1.msra.mxu0 %v454
        %608 = vmatprep.subr.mxu0 0.0
        %609 = vmatpush1.msra.mxu0 %v457
        %610 = vmatprep.subr.mxu0 0.0
        %611 = vmatpush1.msra.mxu0 %v460
        %612 = vmatprep.subr.mxu0 0.0
        %613 = vmatpush1.msra.mxu0 %v463
        %614 = vmatprep.subr.mxu0 0.0
        %615 = vmatpush1.msra.mxu0 %v466
        %616 = vmatprep.subr.mxu0 0.0
        %617 = vmatpush1.msra.mxu0 %v469
        %618 = vmatprep.subr.mxu0 0.0
        %619 = vmatpush1.msra.mxu0 %v472
        %620 = vmatprep.subr.mxu0 0.0
        %621 = vmatpush1.msra.mxu0 %v475
        %622 = vmatprep.subr.mxu0 0.0
        %623 = vmatpush1.msra.mxu0 %v478
        %624 = vmatprep.subr.mxu0 0.0
        %625 = vmatpush1.msra.mxu0 %v481
        %626 = vmatprep.subr.mxu0 0.0
        %627 = vmatpush1.msra.mxu0 %v484
        %628 = vmatprep.subr.mxu0 0.0
        %629 = vmatpush1.msra.mxu0 %v487
        %630 = vmatprep.subr.mxu0 0.0
        %631 = vmatpush1.msra.mxu0 %v490
        %632 = vmatprep.mubr.f32.mxu0 %v389
        %633 = vmatmul.mubr.f32.gmra.mrb[0].mxu0 %v388
        %v634 = vpop.f32.mrb[0].mxu0
        %v635 = vadd.f32 0.0, %v634
        %v636 = vpop.f32.mrb[0].mxu0
        %637 = vmatprep.mubr.f32.mxu0 %v391
        %638 = vmatmul.mubr.f32.gmra.mrb[0].mxu0 %v390
        %v639 = vpop.f32.mrb[0].mxu0
        %v640 = vadd.f32 0.0, %v639
        %v641 = vpop.f32.mrb[0].mxu0
        %642 = vdwg.mxu0
        %643 = vmatprep.subr.mxu0 0.0
        %644 = vmatpush1.xpose.msra.mxu0 %v560
        %645 = vmatprep.subr.mxu0 0.0
        %646 = vmatpush1.xpose.msra.mxu0 %v566
        %647 = vmatprep.subr.mxu0 0.0
        %648 = vmatpush1.xpose.msra.mxu0 0.0
        %649 = vmatprep.subr.mxu0 0.0
        %650 = vmatpush1.xpose.msra.mxu0 0.0
        %651 = vmatprep.subr.mxu0 0.0
        %652 = vmatpush1.xpose.msra.mxu0 0.0
        %653 = vmatprep.subr.mxu0 0.0
        %654 = vmatpush1.xpose.msra.mxu0 0.0
        %655 = vmatprep.subr.mxu0 0.0
        %656 = vmatpush1.xpose.msra.mxu0 0.0
        %657 = vmatprep.subr.mxu0 0.0
        %658 = vmatpush1.xpose.msra.mxu0 0.0
        %659 = vmatprep.subr.mxu0 0.0
        %660 = vmatpush1.xpose.msra.mxu0 0.0
        %661 = vmatprep.subr.mxu0 0.0
        %662 = vmatpush1.xpose.msra.mxu0 0.0
        %663 = vmatprep.subr.mxu0 0.0
        %664 = vmatpush1.xpose.msra.mxu0 0.0
        %665 = vmatprep.subr.mxu0 0.0
        %666 = vmatpush1.xpose.msra.mxu0 0.0
        %667 = vmatprep.subr.mxu0 0.0
        %668 = vmatpush1.xpose.msra.mxu0 0.0
        %669 = vmatprep.subr.mxu0 0.0
        %670 = vmatpush1.xpose.msra.mxu0 0.0
        %671 = vmatprep.subr.mxu0 0.0
        %672 = vmatpush1.xpose.msra.mxu0 0.0
        %673 = vmatprep.subr.mxu0 0.0
        %674 = vmatpush1.xpose.msra.mxu0 0.0
        %675 = vmatprep.subr.mxu0 0.0
        %676 = vmatpush1.xpose.msra.mxu0 0.0
        %677 = vmatprep.subr.mxu0 0.0
        %678 = vmatpush1.xpose.msra.mxu0 0.0
        %679 = vmatprep.subr.mxu0 0.0
        %680 = vmatpush1.xpose.msra.mxu0 0.0
        %681 = vmatprep.subr.mxu0 0.0
        %682 = vmatpush1.xpose.msra.mxu0 0.0
        %683 = vmatprep.subr.mxu0 0.0
        %684 = vmatpush1.xpose.msra.mxu0 0.0
        %685 = vmatprep.subr.mxu0 0.0
        %686 = vmatpush1.xpose.msra.mxu0 0.0
        %687 = vmatprep.subr.mxu0 0.0
        %688 = vmatpush1.xpose.msra.mxu0 0.0
        %689 = vmatprep.subr.mxu0 0.0
        %690 = vmatpush1.xpose.msra.mxu0 0.0
        %691 = vmatprep.subr.mxu0 0.0
        %692 = vmatpush1.xpose.msra.mxu0 0.0
        %693 = vmatprep.subr.mxu0 0.0
        %694 = vmatpush1.xpose.msra.mxu0 0.0
        %695 = vmatprep.subr.mxu0 0.0
        %696 = vmatpush1.xpose.msra.mxu0 0.0
        %697 = vmatprep.subr.mxu0 0.0
        %698 = vmatpush1.xpose.msra.mxu0 0.0
        %699 = vmatprep.subr.mxu0 0.0
        %700 = vmatpush1.xpose.msra.mxu0 0.0
        %701 = vmatprep.subr.mxu0 0.0
        %702 = vmatpush1.xpose.msra.mxu0 0.0
        %703 = vmatprep.subr.mxu0 0.0
        %704 = vmatpush1.xpose.msra.mxu0 0.0
        %705 = vmatprep.subr.mxu0 0.0
        %706 = vmatpush1.xpose.msra.mxu0 0.0
        %707 = vmatprep.mubr.f32.mxu0 0.0
        %708 = vmatmul.mubr.f32.gmra.mrb[0].mxu0 %v558
        %v709 = vpop.f32.mrb[0].mxu0
        %v710 = vadd.f32 0.0, %v709
        %v711 = vpop.f32.mrb[0].mxu0
        %712 = vmatprep.mubr.f32.mxu0 0.0
        %713 = vmatmul.mubr.f32.gmra.mrb[0].mxu0 %v564
        %v714 = vpop.f32.mrb[0].mxu0
        %v715 = vadd.f32 0.0, %v714
        %v716 = vpop.f32.mrb[0].mxu0
        %717 = vdwg.mxu0
        %vm718 = vcmask 130048
        %v719 = vsel %vm718, %v710, -inf
        %720 = vmax.xlane.f32.xlu0 %v719
        %v721 = vpop.xlane.xlu0 %720
        %v722 = vsel %vm718, %v715, -inf
        %723 = vmax.xlane.f32.xlu0 %v722
        %v724 = vpop.xlane.xlu0 %723
        %v725 = vsub.f32 %v710, %v721
        %v726 = vsub.f32 %v715, %v724
        %v727 = vmul.f32 %v725, 1.442695
        %v728 = vpow.pop %v727
        %v729 = vmul.f32 %v726, 1.442695
        %v730 = vpow.pop %v729
        %v731 = vsel %vm718, %v728, 0.0
        %732 = vadd.xlane.f32.xlu0 %v731
        %v733 = vpop.xlane.xlu0 %732
        %v734 = vsel %vm718, %v730, 0.0
        %735 = vadd.xlane.f32.xlu0 %v734
        %v736 = vpop.xlane.xlu0 %735
        %v737 = vrcp.pop %v733
        %v738 = vrcp.pop %v736
        %v739 = vmul.f32 %v733, %v737
        %v740 = vmul.f32 %v736, %v738
        %v741 = vsub.f32 2.0, %v739
        %v742 = vsub.f32 2.0, %v740
        %v743 = vmul.f32 %v737, %v741
        %v744 = vmul.f32 %v738, %v742
        %v746 = vsel %vm718, %v728, 0
        %v749 = vsel %vm718, %v730, 0
        %751 = vmatprep.subr.mxu0 0.0
        %752 = vmatpush1.msra.mxu0 %v635
        %753 = vmatprep.subr.mxu0 0.0
        %754 = vmatpush1.msra.mxu0 %v640
        %755 = vmatprep.subr.mxu0 0.0
        %756 = vmatpush1.msra.mxu0 0.0
        %757 = vmatprep.subr.mxu0 0.0
        %758 = vmatpush1.msra.mxu0 0.0
        %759 = vmatprep.subr.mxu0 0.0
        %760 = vmatpush1.msra.mxu0 0.0
        %761 = vmatprep.subr.mxu0 0.0
        %762 = vmatpush1.msra.mxu0 0.0
        %763 = vmatprep.subr.mxu0 0.0
        %764 = vmatpush1.msra.mxu0 0.0
        %765 = vmatprep.subr.mxu0 0.0
        %766 = vmatpush1.msra.mxu0 0.0
        %767 = vmatprep.subr.mxu0 0.0
        %768 = vmatpush1.msra.mxu0 0.0
        %769 = vmatprep.subr.mxu0 0.0
        %770 = vmatpush1.msra.mxu0 0.0
        %771 = vmatprep.subr.mxu0 0.0
        %772 = vmatpush1.msra.mxu0 0.0
        %773 = vmatprep.subr.mxu0 0.0
        %774 = vmatpush1.msra.mxu0 0.0
        %775 = vmatprep.subr.mxu0 0.0
        %776 = vmatpush1.msra.mxu0 0.0
        %777 = vmatprep.subr.mxu0 0.0
        %778 = vmatpush1.msra.mxu0 0.0
        %779 = vmatprep.subr.mxu0 0.0
        %780 = vmatpush1.msra.mxu0 0.0
        %781 = vmatprep.subr.mxu0 0.0
        %782 = vmatpush1.msra.mxu0 0.0
        %783 = vmatprep.subr.mxu0 0.0
        %784 = vmatpush1.msra.mxu0 0.0
        %785 = vmatprep.subr.mxu0 0.0
        %786 = vmatpush1.msra.mxu0 0.0
        %787 = vmatprep.subr.mxu0 0.0
        %788 = vmatpush1.msra.mxu0 0.0
        %789 = vmatprep.subr.mxu0 0.0
        %790 = vmatpush1.msra.mxu0 0.0
        %791 = vmatprep.subr.mxu0 0.0
        %792 = vmatpush1.msra.mxu0 0.0
        %793 = vmatprep.subr.mxu0 0.0
        %794 = vmatpush1.msra.mxu0 0.0
        %795 = vmatprep.subr.mxu0 0.0
        %796 = vmatpush1.msra.mxu0 0.0
        %797 = vmatprep.subr.mxu0 0.0
        %798 = vmatpush1.msra.mxu0 0.0
        %799 = vmatprep.subr.mxu0 0.0
        %800 = vmatpush1.msra.mxu0 0.0
        %801 = vmatprep.subr.mxu0 0.0
        %802 = vmatpush1.msra.mxu0 0.0
        %803 = vmatprep.subr.mxu0 0.0
        %804 = vmatpush1.msra.mxu0 0.0
        %805 = vmatprep.subr.mxu0 0.0
        %806 = vmatpush1.msra.mxu0 0.0
        %807 = vmatprep.subr.mxu0 0.0
        %808 = vmatpush1.msra.mxu0 0.0
        %809 = vmatprep.subr.mxu0 0.0
        %810 = vmatpush1.msra.mxu0 0.0
        %811 = vmatprep.subr.mxu0 0.0
        %812 = vmatpush1.msra.mxu0 0.0
        %813 = vmatprep.subr.mxu0 0.0
        %814 = vmatpush1.msra.mxu0 0.0
        %815 = vmatprep.mubr.f32.mxu0 0.0
        %816 = vmatmul.mubr.f32.gmra.mrb[0].mxu0 %v746
        %v817 = vpop.f32.mrb[0].mxu0
        %v818 = vadd.f32 0.0, %v817
        %v819 = vpop.f32.mrb[0].mxu0
        %820 = vmatprep.mubr.f32.mxu0 0.0
        %821 = vmatmul.mubr.f32.gmra.mrb[0].mxu0 %v749
        %v822 = vpop.f32.mrb[0].mxu0
        %v823 = vadd.f32 0.0, %v822
        %v824 = vpop.f32.mrb[0].mxu0
        %825 = vdwg.mxu0
        %v826 = vmul.f32 %v818, %v743
        %v827 = vmul.f32 %v823, %v744
        %s828 = smul.u32 %s29, 32
        %s829 = smul.addr %s828, 8
        %s830 = scalar_lea.vmem [#allocation9], %s829
        %v831 = vld [vmem:[%s830] sm:$0xff]
        %v832 = vld [vmem:[%s830 + $0x8] sm:$0xff]
        %v833 = vld [vmem:[%s830 + $0x10] sm:$0xff]
        %v834 = vld [vmem:[%s830 + $0x18] sm:$0xff]
        %v835 = vld [vmem:[%s830 + $0x20] sm:$0xff]
        %v836 = vld [vmem:[%s830 + $0x28] sm:$0xff]
        %v837 = vld [vmem:[%s830 + $0x30] sm:$0xff]
        %v838 = vld [vmem:[%s830 + $0x38] sm:$0xff]
        %v839 = vld [vmem:[%s830 + $0x40] sm:$0xff]
        %v840 = vld [vmem:[%s830 + $0x48] sm:$0xff]
        %v841 = vld [vmem:[%s830 + $0x50] sm:$0xff]
        %v842 = vld [vmem:[%s830 + $0x58] sm:$0xff]
        %v843 = vld [vmem:[%s830 + $0x60] sm:$0xff]
        %v844 = vld [vmem:[%s830 + $0x68] sm:$0xff]
        %v845 = vld [vmem:[%s830 + $0x70] sm:$0xff]
        %v846 = vld [vmem:[%s830 + $0x78] sm:$0xff]
        %v847 = vld [vmem:[%s830 + $0x80] sm:$0xff]
        %v848 = vld [vmem:[%s830 + $0x88] sm:$0xff]
        %v849 = vld [vmem:[%s830 + $0x90] sm:$0xff]
        %v850 = vld [vmem:[%s830 + $0x98] sm:$0xff]
        %v851 = vld [vmem:[%s830 + $0xa0] sm:$0xff]
        %v852 = vld [vmem:[%s830 + $0xa8] sm:$0xff]
        %v853 = vld [vmem:[%s830 + $0xb0] sm:$0xff]
        %v854 = vld [vmem:[%s830 + $0xb8] sm:$0xff]
        %v855 = vld [vmem:[%s830 + $0xc0] sm:$0xff]
        %v856 = vld [vmem:[%s830 + $0xc8] sm:$0xff]
        %v857 = vld [vmem:[%s830 + $0xd0] sm:$0xff]
        %v858 = vld [vmem:[%s830 + $0xd8] sm:$0xff]
        %v859 = vld [vmem:[%s830 + $0xe0] sm:$0xff]
        %v860 = vld [vmem:[%s830 + $0xe8] sm:$0xff]
        %v861 = vld [vmem:[%s830 + $0xf0] sm:$0xff]
        %v862 = vld [vmem:[%s830 + $0xf8] sm:$0xff]
        %863 = vmatprep.subr.mxu0 %v832
        %864 = vmatpush1.msra.mxu0 %v831
        %865 = vmatprep.subr.mxu0 %v834
        %866 = vmatpush1.msra.mxu0 %v833
        %867 = vmatprep.subr.mxu0 %v836
        %868 = vmatpush1.msra.mxu0 %v835
        %869 = vmatprep.subr.mxu0 %v838
        %870 = vmatpush1.msra.mxu0 %v837
        %871 = vmatprep.subr.mxu0 %v840
        %872 = vmatpush1.msra.mxu0 %v839
        %873 = vmatprep.subr.mxu0 %v842
        %874 = vmatpush1.msra.mxu0 %v841
        %875 = vmatprep.subr.mxu0 %v844
        %876 = vmatpush1.msra.mxu0 %v843
        %877 = vmatprep.subr.mxu0 %v846
        %878 = vmatpush1.msra.mxu0 %v845
        %879 = vmatprep.subr.mxu0 %v848
        %880 = vmatpush1.msra.mxu0 %v847
        %881 = vmatprep.subr.mxu0 %v850
        %882 = vmatpush1.msra.mxu0 %v849
        %883 = vmatprep.subr.mxu0 %v852
        %884 = vmatpush1.msra.mxu0 %v851
        %885 = vmatprep.subr.mxu0 %v854
        %886 = vmatpush1.msra.mxu0 %v853
        %887 = vmatprep.subr.mxu0 %v856
        %888 = vmatpush1.msra.mxu0 %v855
        %889 = vmatprep.subr.mxu0 %v858
        %890 = vmatpush1.msra.mxu0 %v857
        %891 = vmatprep.subr.mxu0 %v860
        %892 = vmatpush1.msra.mxu0 %v859
        %893 = vmatprep.subr.mxu0 %v862
        %894 = vmatpush1.msra.mxu0 %v861
        %895 = vmatprep.subr.mxu0 0.0
        %896 = vmatpush1.msra.mxu0 0.0
        %897 = vmatprep.subr.mxu0 0.0
        %898 = vmatpush1.msra.mxu0 0.0
        %899 = vmatprep.subr.mxu0 0.0
        %900 = vmatpush1.msra.mxu0 0.0
        %901 = vmatprep.subr.mxu0 0.0
        %902 = vmatpush1.msra.mxu0 0.0
        %903 = vmatprep.subr.mxu0 0.0
        %904 = vmatpush1.msra.mxu0 0.0
        %905 = vmatprep.subr.mxu0 0.0
        %906 = vmatpush1.msra.mxu0 0.0
        %907 = vmatprep.subr.mxu0 0.0
        %908 = vmatpush1.msra.mxu0 0.0
        %909 = vmatprep.subr.mxu0 0.0
        %910 = vmatpush1.msra.mxu0 0.0
        %911 = vmatprep.subr.mxu0 0.0
        %912 = vmatpush1.msra.mxu0 0.0
        %913 = vmatprep.subr.mxu0 0.0
        %914 = vmatpush1.msra.mxu0 0.0
        %915 = vmatprep.subr.mxu0 0.0
        %916 = vmatpush1.msra.mxu0 0.0
        %917 = vmatprep.subr.mxu0 0.0
        %918 = vmatpush1.msra.mxu0 0.0
        %919 = vmatprep.subr.mxu0 0.0
        %920 = vmatpush1.msra.mxu0 0.0
        %921 = vmatprep.subr.mxu0 0.0
        %922 = vmatpush1.msra.mxu0 0.0
        %923 = vmatprep.subr.mxu0 0.0
        %924 = vmatpush1.msra.mxu0 0.0
        %925 = vmatprep.subr.mxu0 0.0
        %926 = vmatpush1.msra.mxu0 0.0
        %927 = vmatprep.mubr.f32.mxu0 0.0
        %928 = vmatmul.mubr.f32.gmra.mrb[0].mxu0 %v826
        %v929 = vpop.f32.mrb[0].mxu0
        %v930 = vadd.f32 0.0, %v929
        %v931 = vpop.f32.mrb[0].mxu0
        %v932 = vadd.f32 0.0, %v931
        %933 = vmatprep.mubr.f32.mxu0 0.0
        %934 = vmatmul.mubr.f32.gmra.mrb[0].mxu0 %v827
        %v935 = vpop.f32.mrb[0].mxu0
        %v936 = vadd.f32 0.0, %v935
        %v937 = vpop.f32.mrb[0].mxu0
        %v938 = vadd.f32 0.0, %v937
        %939 = vdwg.mxu0
        // Predicated region
        $region61: #{tpu_custom_call.1} parent=43 // pred_check
          %p940 = pneg %p311
        $region62: #{tpu_custom_call.1} parent=43 // pred_check_branch
          %942 = sbr.rel (%p940) target = $region64
        $region63: #{tpu_custom_call.1} parent=43 // pred_region
          %943 = vst [vmem:[#allocation3] sm:$0xff] %v930
          %944 = vst [vmem:[#allocation3 + $0x8] sm:$0xff] %v932
          %945 = vst [vmem:[#allocation3 + $0x10] sm:$0xff] %v936
          %946 = vst [vmem:[#allocation3 + $0x18] sm:$0xff] %v938
        $region64: #{tpu_custom_call.1} parent=43 // pred_fallthru
          _
        %p947 = scmp.gt.s32.totalorder %s29, 0
        // Predicated region
        $region65: #{tpu_custom_call.1} parent=43 // pred_check
          %p948 = pneg %p947
        $region66: #{tpu_custom_call.1} parent=43 // pred_check_branch
          %950 = sbr.rel (%p948) target = $region68
        $region67: #{tpu_custom_call.1} parent=43 // pred_region
          %v951 = vld [vmem:[#allocation3] sm:$0xff]
          %v952 = vld [vmem:[#allocation3 + $0x8] sm:$0xff]
          %v953 = vld [vmem:[#allocation3 + $0x10] sm:$0xff]
          %v954 = vld [vmem:[#allocation3 + $0x18] sm:$0xff]
          %v955 = vadd.f32 %v951, %v930
          %v956 = vadd.f32 %v952, %v932
          %v957 = vadd.f32 %v953, %v936
          %v958 = vadd.f32 %v954, %v938
          %959 = vst [vmem:[#allocation3] sm:$0xff] %v955
          %960 = vst [vmem:[#allocation3 + $0x8] sm:$0xff] %v956
          %961 = vst [vmem:[#allocation3 + $0x10] sm:$0xff] %v957
          %962 = vst [vmem:[#allocation3 + $0x18] sm:$0xff] %v958
        $region68: #{tpu_custom_call.1} parent=43 // pred_fallthru
          _
        %p963 = scmp.eq.s32.totalorder %s29, 1
        // Predicated region
        $region69: #{tpu_custom_call.1} parent=43 // pred_check
          %p964 = pneg %p963
        $region70: #{tpu_custom_call.1} parent=43 // pred_check_branch
          %966 = sbr.rel (%p964) target = $region72
        $region71: #{tpu_custom_call.1} parent=43 // pred_region
          %v967 = vld [vmem:[%s274] sm:$0xff]
          %v968 = vld [vmem:[%s274 + $0x8] sm:$0xff]
          %v969 = vld [vmem:[%s274 + $0x10] sm:$0xff]
          %v970 = vld [vmem:[%s274 + $0x18] sm:$0xff]
          %v971 = vld [vmem:[#allocation3] sm:$0xff]
          %v972 = vld [vmem:[#allocation3 + $0x8] sm:$0xff]
          %v973 = vld [vmem:[#allocation3 + $0x10] sm:$0xff]
          %v974 = vld [vmem:[#allocation3 + $0x18] sm:$0xff]
          %v975 = vadd.f32 %v967, %v971
          %v976 = vadd.f32 %v968, %v972
          %v977 = vadd.f32 %v969, %v973
          %v978 = vadd.f32 %v970, %v974
          %v979 = vld [vmem:[%s5] sm:$0x3]
          %v981 = vlaneseq
          %v982 = vshrl.u32 %v981, 7
          %v983 = vsub.s32 0, %v982
          %v984 = vrot.slane %v979, %v983
          %v985 = vlaneseq
          %v986 = vshrl.u32 %v985, 7
          %v987 = vsub.s32 1, %v986
          %v988 = vrot.slane %v979, %v987
          %v991 = vadd.f32 %v975, %v984
          %v992 = vadd.f32 %v976, %v988
          %v993 = vadd.f32 %v977, %v984
          %v994 = vadd.f32 %v978, %v988
          %995 = vst [vmem:[%s310] sm:$0xff] %v991
          %996 = vst [vmem:[%s310 + $0x8] sm:$0xff] %v992
          %997 = vst [vmem:[%s310 + $0x10] sm:$0xff] %v993
          %998 = vst [vmem:[%s310 + $0x18] sm:$0xff] %v994
        $region72: #{tpu_custom_call.1} parent=43 // pred_fallthru
          _
        %s999 = sand.u32 %s175, 1
        %s1000 = scalar_lea.sflag [#allocation6], %s999
        %s1001 = sand.u32 %s175, 1
        %s1002 = smul.addr %s1001, 32
        %s1003 = scalar_lea.vmem [#allocation10], %s1002
        // Predicated region
        $region73: #{tpu_custom_call.1} parent=43 // pred_check
          %p1004 = pneg %p185
        $region74: #{tpu_custom_call.1} parent=43 // pred_check_branch
          %1006 = sbr.rel (%p1004) target = $region76
        $region75: #{tpu_custom_call.1} parent=43 // pred_region
          %s1008 = ssub.s32 512, 512
          %1009 = vsyncadd %s1000, %s1008
          %s1010 = smul.addr %s28, 4
          %s1011 = smul.addr %s1010, 128
          %s1012 = scalar_lea.hbm %s6, %s1011
          %s1013 = sshll.u32 %s1003, 4
          %s1014 = int_to_ptr.vmem [resolvable:$true] %s1013
          %1019 = dma.vmem_to_hbm [thread:$0]  %s1014, 512, %s1012, %s1000, 256, 256, 16
        $region76: #{tpu_custom_call.1} parent=43 // pred_fallthru
          _
      $region44: #{tpu_custom_call.1} parent=5 // pred_fallthru
        _
      %p1020 = scmp.le.s32.totalorder 2, %s19
      // Predicated region
      $region77: #{tpu_custom_call.1} parent=5 // pred_check
        %p1021 = pneg %p1020
      $region78: #{tpu_custom_call.1} parent=5 // pred_check_branch
        %1023 = sbr.rel (%p1021) target = $region80
      $region79: #{tpu_custom_call.1} parent=5 // pred_region
        %s1024 = ssub.s32 %s19, 2
        // Predicated region
        $region81: #{tpu_custom_call.1} parent=79 // pred_check
          %p1025 = pneg %p191
        $region82: #{tpu_custom_call.1} parent=79 // pred_check_branch
          %1027 = sbr.rel (%p1025) target = $region84
        $region83: #{tpu_custom_call.1} parent=79 // pred_region
          %s1028 = sand.u32 %s176, 1
          %s1029 = scalar_lea.sflag [#allocation6], %s1028
          %s1030 = sand.u32 %s176, 1
          %s1031 = smul.addr %s1030, 32
          %s1032 = scalar_lea.vmem [#allocation10], %s1031
          %1033 = dma.done %s1029, 512
        $region84: #{tpu_custom_call.1} parent=79 // pred_fallthru
          _
      $region80: #{tpu_custom_call.1} parent=5 // pred_fallthru
        _
    $region6: #{tpu_custom_call.1} parent=1 // loop_footer
      %s23 = sadd.s32 1, %s19
    $region7: #{tpu_custom_call.1} parent=1 // loop_footer_branch
      %18 = sbr.rel target = $region3
    $region8: #{tpu_custom_call.1} parent=1 // loop_exit
      _
    %1034 = vsyncpa [#allocation5], 1
    %s1035 = scalar_lea.sflag [#allocation5], 1
    %1036 = vsyncpa %s1035, 1
    %1037 = vsyncpa [#allocation8], 1
    %1038 = vsyncpa [#allocation6], 1
    %s1039 = scalar_lea.sflag [#allocation6], 1
    %1040 = vsyncpa %s1039, 1

</llo_original>
